<compile_context>
chip_gen: v7x
topology: tpu7x:2x2x1
jax: 0.10.0
libtpu: 0.0.40
codegen_flags: <defaults>
</compile_context>

<pallas_src>
import functools

import jax
import jax.numpy as jnp
from jax.experimental import pallas as pl
from jax.experimental.pallas import tpu as pltpu


LN_EPS = 1e-6  # matches nn.LayerNorm(dim, eps=1e-06) in the module


def _round_up(v, m):
    return (v + m - 1) // m * m


@functools.lru_cache(maxsize=None)
def _usable_vmem_bytes():
    """~80% of physical VMEM (v5e/v6e: 128 MiB, v7x: 64 MiB); safe fallback."""
    try:
        cap = int(pltpu.get_tpu_info().vmem_capacity_bytes)
    except Exception:
        cap = 64 << 20  # conservative: valid on every generation
    return int(cap * 0.80)


def _ln_affine(h, gamma, beta, dim, out_dtype):
    # One-pass LayerNorm statistics over the *real* feature width `dim`.
    # The feature axis may be zero-padded up to a lane multiple; the padded
    # columns of W / bias are exactly zero (wrapper guarantees it), so they
    # contribute nothing to s1/s2 and dividing by the real `dim` yields the
    # exact biased mean/variance (torch LayerNorm semantics).
    # NOTE: one-pass E[h^2]-E[h]^2 in f32 is fine for normalized activations;
    # switch to a shifted two-pass variant if |mean| >> std in your model.
    inv_dim = jnp.float32(1.0 / dim)
    s1 = jnp.sum(h, axis=-1, keepdims=True)
    s2 = jnp.sum(h * h, axis=-1, keepdims=True)
    mean = s1 * inv_dim
    var = jnp.maximum(s2 * inv_dim - mean * mean, 0.0)
    norm = (h - mean) * jax.lax.rsqrt(var + LN_EPS)
    return (norm * gamma + beta).astype(out_dtype)


def _projection_kernel_fused(x_ref, w_ref, b_ref, g_ref, be_ref, o_ref, *, dim):
    # Single K step: pointwise (kernel_size=1) conv == one MXU matmul against
    # a resident, single-buffered W, fused with the LayerNorm finalize.
    h = jnp.dot(x_ref[...], w_ref[...], preferred_element_type=jnp.float32)
    h = h + b_ref[...]
    o_ref[...] = _ln_affine(h, g_ref[...], be_ref[...], dim, o_ref.dtype)


def _projection_kernel_kblocked(x_ref, w_ref, b_ref, g_ref, be_ref, o_ref,
                                acc_ref, *, dim):
    # K-blocked variant: in_dim is reduced over grid axis 1 ("arbitrary") into
    # an f32 VMEM accumulator; LayerNorm runs once on the last K step.
    k = pl.program_id(1)

    @pl.when(k == 0)
    def _():
        acc_ref[...] = jnp.zeros_like(acc_ref)

    acc_ref[...] += jnp.dot(x_ref[...], w_ref[...],
                            preferred_element_type=jnp.float32)

    @pl.when(k == pl.num_programs(1) - 1)
    def _():
        h = acc_ref[...] + b_ref[...]
        o_ref[...] = _ln_affine(h, g_ref[...], be_ref[...], dim, o_ref.dtype)


def _est_vmem_bytes(tm, tk, nk, dim_p, x_isz, w_isz, o_isz):
    x_buf = 2 * tm * tk * x_isz                          # double-buffered x tile
    w_buf = (1 if nk == 1 else 2) * tk * dim_p * w_isz   # Buffered(1) resident W / 2x K tiles
    o_buf = 2 * tm * dim_p * o_isz                       # double-buffered out tile
    par_buf = 3 * dim_p * 4                              # Buffered(1) f32 bias/gamma/beta
    acc_buf = tm * dim_p * 4 if nk > 1 else 0            # f32 scratch accumulator
    live = 3 * tm * dim_p * 4                            # live f32 intermediates (h, h*h, norm)
    return x_buf + w_buf + o_buf + par_buf + acc_buf + live


@functools.partial(jax.jit, static_argnames=("tm", "tk", "matmul_dtype"))
def projection_forward(x, w, b, gamma, beta, *, tm=None, tk=None, matmul_dtype=None):
    """x: (B, L, in_dim) -> (B, L, dim).  Dropout (p=0 / eval) is identity."""
    # TODO(synk): dropout with drop_rate > 0 (training mode) would need
    # pltpu.prng_* masking; the module default p=0.0 / eval mode is identity.
    B, L, in_dim = x.shape
    dim = w.shape[1]
    M = B * L

    out_dtype = x.dtype
    if matmul_dtype is not None:
        # Optional lower-precision matmul path (bf16 feeds the MXU at peak on
        # v6e/v7x); accumulation stays f32 via preferred_element_type.
        x = x.astype(matmul_dtype)
        w = w.astype(matmul_dtype)

    x_isz = jnp.dtype(x.dtype).itemsize
    w_isz = jnp.dtype(w.dtype).itemsize
    o_isz = jnp.dtype(out_dtype).itemsize

    # Sublane packing of the activation dtype (f32: 8, bf16: 16, int8: 32).
    pack = 8 * max(1, 4 // x_isz)

    usable = _usable_vmem_bytes()

    # Lane-dense output: pad feature dim to a 128 multiple only when needed
    # (typical model dims are already lane-aligned -> zero extra HBM traffic).
    dim_p = _round_up(dim, 128)
    pad_col = dim_p - dim

    # ---- K (in_dim) blocking: bound the W working set -----------------------
    if tk is not None:
        assert tk == in_dim or (tk % 128 == 0 and in_dim % tk == 0), (
            "tk must equal in_dim or be a 128-multiple divisor of in_dim")
        tk_eff = tk
    else:
        tk_eff = in_dim
        w_budget = usable // 3
        if in_dim % 128 == 0 and in_dim > 128 and in_dim * dim_p * w_isz > w_budget:
            for mult in range(in_dim // 128, 0, -1):
                cand = mult * 128
                if in_dim % cand == 0 and 2 * cand * dim_p * w_isz <= w_budget:
                    tk_eff = cand
                    break
        # TODO(synk): if in_dim is not a 128 multiple and W still overflows the
        # budget, zero-pad W rows (exact: zero rows add nothing) and K-block.
    nk = in_dim // tk_eff

    # ---- Row (M) tiling ------------------------------------------------------
    # Keep >= 2 row tiles when possible so the "parallel" axis can shard across
    # the 2 TensorCores on v7x; otherwise pick the largest tile fitting VMEM.
    tm_cap = max(pack, _round_up(pl.cdiv(M, 2), pack))
    if tm is not None:
        tm_eff = max(pack, min(_round_up(tm, pack), tm_cap))
    else:
        cands = sorted({min(c, tm_cap) for c in (1024, 512, 256, 128, 64, 32, 16, 8)
                        if c >= pack} | {pack}, reverse=True)
        tm_eff = pack
        for cand in cands:
            if _est_vmem_bytes(cand, tk_eff, nk, dim_p, x_isz, w_isz, o_isz) <= usable:
                tm_eff = cand
                break
    grid_m = pl.cdiv(M, tm_eff)  # ragged last tile handled by Pallas (no jnp.pad of x)

    # ---- Parameter prep ------------------------------------------------------
    x2d = x.reshape(M, in_dim)   # free: contiguous collapse, no HBM copy

    # Padded columns MUST remain exactly zero: the LN statistics rely on the
    # padded lanes contributing nothing to s1/s2.
    w_p = jnp.pad(w, ((0, 0), (0, pad_col))) if pad_col else w

    def _prep_vec(v):
        v = v.astype(jnp.float32)
        if pad_col:
            v = jnp.pad(v, (0, pad_col))
        return v.reshape(1, dim_p)

    b_p, g_p, be_p = _prep_vec(b), _prep_vec(gamma), _prep_vec(beta)

    single_buf = pl.Buffered(1)  # grid-invariant operands: no double buffering

    if nk == 1:
        kernel = functools.partial(_projection_kernel_fused, dim=dim)
        grid = (grid_m,)
        in_specs = [
            pl.BlockSpec((tm_eff, in_dim), lambda i: (i, 0)),
            pl.BlockSpec((in_dim, dim_p), lambda i: (0, 0), pipeline_mode=single_buf),
            pl.BlockSpec((1, dim_p), lambda i: (0, 0), pipeline_mode=single_buf),
            pl.BlockSpec((1, dim_p), lambda i: (0, 0), pipeline_mode=single_buf),
            pl.BlockSpec((1, dim_p), lambda i: (0, 0), pipeline_mode=single_buf),
        ]
        out_specs = pl.BlockSpec((tm_eff, dim_p), lambda i: (i, 0))
        scratch_shapes = []
        dims_sem = ("parallel",)
    else:
        kernel = functools.partial(_projection_kernel_kblocked, dim=dim)
        grid = (grid_m, nk)
        in_specs = [
            pl.BlockSpec((tm_eff, tk_eff), lambda i, k: (i, k)),
            pl.BlockSpec((tk_eff, dim_p), lambda i, k: (k, 0)),  # varies with k: keep double-buffered
            pl.BlockSpec((1, dim_p), lambda i, k: (0, 0), pipeline_mode=single_buf),
            pl.BlockSpec((1, dim_p), lambda i, k: (0, 0), pipeline_mode=single_buf),
            pl.BlockSpec((1, dim_p), lambda i, k: (0, 0), pipeline_mode=single_buf),
        ]
        out_specs = pl.BlockSpec((tm_eff, dim_p), lambda i, k: (i, 0))
        scratch_shapes = [pltpu.VMEM((tm_eff, dim_p), jnp.float32)]
        dims_sem = ("parallel", "arbitrary")

    est = _est_vmem_bytes(tm_eff, tk_eff, nk, dim_p, x_isz, w_isz, o_isz)
    vmem_bytes = min(usable, max(int(1.2 * est) + (4 << 20), 32 << 20))

    cost = pl.CostEstimate(
        flops=2 * M * in_dim * dim_p + 8 * M * dim_p,
        transcendentals=M,
        bytes_accessed=(M * in_dim * x_isz + in_dim * dim_p * w_isz
                        + M * dim_p * o_isz + 3 * dim_p * 4),
    )

    out2d = pl.pallas_call(
        kernel,
        out_shape=jax.ShapeDtypeStruct((M, dim_p), out_dtype),
        grid_spec=pltpu.PrefetchScalarGridSpec(
            num_scalar_prefetch=0,
            grid=grid,
            in_specs=in_specs,
            out_specs=out_specs,
            scratch_shapes=scratch_shapes,
        ),
        compiler_params=pltpu.CompilerParams(
            dimension_semantics=dims_sem,
            vmem_limit_bytes=vmem_bytes,
        ),
        cost_estimate=cost,
    )(x2d, w_p, b_p, g_p, be_p)

    if pad_col:
        out2d = out2d[:, :dim]
    return out2d.reshape(B, L, dim)


def reference_forward(x, w, b, gamma, beta):
    h = jnp.einsum("bli,io->blo", x, w,
                   precision=jax.lax.Precision.HIGHEST) + b
    mean = jnp.mean(h, axis=-1, keepdims=True)
    var = jnp.mean((h - mean) ** 2, axis=-1, keepdims=True)
    return (h - mean) / jnp.sqrt(var + LN_EPS) * gamma + beta


if __name__ == "__main__":
    key = jax.random.PRNGKey(0)

    def make_inputs(k, B, L, in_dim, dim):
        kx, kw, kb, kg, kbe = jax.random.split(k, 5)
        x = jax.random.normal(kx, (B, L, in_dim), jnp.float32)
        # Conv1d(kernel_size=1) weight (out, in, 1) stored here as (in, out).
        w = jax.random.normal(kw, (in_dim, dim), jnp.float32) / (in_dim ** 0.5)
        b = 0.1 * jax.random.normal(kb, (dim,), jnp.float32)
        gamma = 1.0 + 0.1 * jax.random.normal(kg, (dim,), jnp.float32)
        beta = 0.1 * jax.random.normal(kbe, (dim,), jnp.float32)
        return x, w, b, gamma, beta

    def check(name, out, ref):
        assert out.shape == ref.shape, f"{name}: shape {out.shape} vs {ref.shape}"
        err = float(jnp.max(jnp.abs(out - ref)))
        assert err < 5e-3, f"{name}: max abs err {err}"

    k1, k2, k3 = jax.random.split(key, 3)

    # 1) Module-like small shapes (resident-W fused path, dim padded 32 -> 128).
    args = make_inputs(k1, 2, 8, 32, 32)
    out = projection_forward(*args)
    jax.block_until_ready(out)
    check("fused", out, reference_forward(*args))

    # 2) Lane-aligned dim fast path (no feature padding, no trailing slice).
    args = make_inputs(k2, 2, 8, 32, 128)
    out = projection_forward(*args)
    jax.block_until_ready(out)
    check("aligned", out, reference_forward(*args))

    # 3) Forced K-blocking (in_dim=256 reduced in tk=128 steps) + dim padding.
    args = make_inputs(k3, 2, 8, 256, 64)
    out = projection_forward(*args, tk=128)
    jax.block_until_ready(out)
    check("k-blocked", out, reference_forward(*args))

    print("KERNEL_OK")
</pallas_src>

<mosaic_0001>
module attributes {stable_mosaic.version = 11 : i64} {
  func.func @_projection_kernel_fused(%arg0: i32, %arg1: memref<8x32xf32, #tpu.memory_space<vmem>>, %arg2: memref<32x128xf32, #tpu.memory_space<vmem>>, %arg3: memref<1x128xf32, #tpu.memory_space<vmem>>, %arg4: memref<1x128xf32, #tpu.memory_space<vmem>>, %arg5: memref<1x128xf32, #tpu.memory_space<vmem>>, %arg6: memref<8x128xf32, #tpu.memory_space<vmem>>) attributes {dimension_semantics = [#tpu.dimension_semantics<parallel>], iteration_bounds = array<i64: 2>, scalar_prefetch = 0 : i64, scratch_operands = 0 : i64, tpu.core_type = #tpu.core_type<tc>, window_params = [{transform_indices = @transform_0, window_bounds = array<i64: 8, 32>}, {pipeline_mode = #tpu.pipeline_mode<synchronous>, transform_indices = @transform_1, window_bounds = array<i64: 32, 128>}, {pipeline_mode = #tpu.pipeline_mode<synchronous>, transform_indices = @transform_2, window_bounds = array<i64: 1, 128>}, {pipeline_mode = #tpu.pipeline_mode<synchronous>, transform_indices = @transform_3, window_bounds = array<i64: 1, 128>}, {pipeline_mode = #tpu.pipeline_mode<synchronous>, transform_indices = @transform_4, window_bounds = array<i64: 1, 128>}, {transform_indices = @transform_5, window_bounds = array<i64: 8, 128>}]} {
    %c0 = arith.constant 0 : index
    %c0_0 = arith.constant 0 : index
    %0 = vector.load %arg1[%c0, %c0_0] : memref<8x32xf32, #tpu.memory_space<vmem>>, vector<8x32xf32>
    %c0_1 = arith.constant 0 : index
    %c0_2 = arith.constant 0 : index
    %1 = vector.load %arg2[%c0_1, %c0_2] : memref<32x128xf32, #tpu.memory_space<vmem>>, vector<32x128xf32>
    %cst = arith.constant dense<0.000000e+00> : vector<8x128xf32>
    %2 = tpu.matmul %0, %1, %cst {dimension_numbers = #tpu.dot_dimension_numbers<[1], [0], [0], [1], [0, 0, 1, 1], [], []>} : vector<8x32xf32>, vector<32x128xf32>, vector<8x128xf32> -> vector<8x128xf32>
    %c0_3 = arith.constant 0 : index
    %c0_4 = arith.constant 0 : index
    %3 = vector.load %arg3[%c0_3, %c0_4] : memref<1x128xf32, #tpu.memory_space<vmem>>, vector<1x128xf32>
    %4 = vector.broadcast %3 : vector<1x128xf32> to vector<8x128xf32>
    %5 = arith.addf %2, %4 : vector<8x128xf32>
    %c0_5 = arith.constant 0 : index
    %c0_6 = arith.constant 0 : index
    %6 = vector.load %arg4[%c0_5, %c0_6] : memref<1x128xf32, #tpu.memory_space<vmem>>, vector<1x128xf32>
    %c0_7 = arith.constant 0 : index
    %c0_8 = arith.constant 0 : index
    %7 = vector.load %arg5[%c0_7, %c0_8] : memref<1x128xf32, #tpu.memory_space<vmem>>, vector<1x128xf32>
    %cst_9 = arith.constant dense<0.000000e+00> : vector<8xf32>
    %8 = vector.multi_reduction <add>, %5, %cst_9 [1] : vector<8x128xf32> to vector<8xf32>
    %9 = vector.shape_cast %8 : vector<8xf32> to vector<8x1xf32>
    %10 = arith.mulf %5, %5 : vector<8x128xf32>
    %cst_10 = arith.constant dense<0.000000e+00> : vector<8xf32>
    %11 = vector.multi_reduction <add>, %10, %cst_10 [1] : vector<8x128xf32> to vector<8xf32>
    %12 = vector.shape_cast %11 : vector<8xf32> to vector<8x1xf32>
    %cst_11 = arith.constant 3.125000e-02 : f32
    %13 = vector.broadcast %cst_11 : f32 to vector<8x1xf32>
    %14 = arith.mulf %9, %13 : vector<8x1xf32>
    %cst_12 = arith.constant 3.125000e-02 : f32
    %15 = vector.broadcast %cst_12 : f32 to vector<8x1xf32>
    %16 = arith.mulf %12, %15 : vector<8x1xf32>
    %17 = arith.mulf %14, %14 : vector<8x1xf32>
    %18 = arith.subf %16, %17 : vector<8x1xf32>
    %cst_13 = arith.constant 0.000000e+00 : f32
    %19 = vector.broadcast %cst_13 : f32 to vector<8x1xf32>
    %20 = arith.maximumf %18, %19 : vector<8x1xf32>
    %21 = vector.broadcast %14 : vector<8x1xf32> to vector<8x128xf32>
    %22 = arith.subf %5, %21 : vector<8x128xf32>
    %cst_14 = arith.constant 9.99999997E-7 : f32
    %23 = vector.broadcast %cst_14 : f32 to vector<8x1xf32>
    %24 = arith.addf %20, %23 : vector<8x1xf32>
    %25 = math.rsqrt %24 : vector<8x1xf32>
    %26 = vector.broadcast %25 : vector<8x1xf32> to vector<8x128xf32>
    %27 = arith.mulf %22, %26 : vector<8x128xf32>
    %28 = vector.broadcast %6 : vector<1x128xf32> to vector<8x128xf32>
    %29 = arith.mulf %27, %28 : vector<8x128xf32>
    %30 = vector.broadcast %7 : vector<1x128xf32> to vector<8x128xf32>
    %31 = arith.addf %29, %30 : vector<8x128xf32>
    %c0_15 = arith.constant 0 : index
    %c0_16 = arith.constant 0 : index
    %32 = vector.load %arg6[%c0_15, %c0_16] : memref<8x128xf32, #tpu.memory_space<vmem>>, vector<8x128xf32>
    tpu.vector_store %arg6[%c0_15, %c0_16], %31 {strides = array<i32>} : memref<8x128xf32, #tpu.memory_space<vmem>>, vector<8x128xf32>,
    return
  }
  func.func @transform_0(%arg0: i32) -> (i32, i32) {
    %c0_i32 = arith.constant 0 : i32
    %c0_i32_0 = arith.constant 0 : i32
    return %arg0, %c0_i32 : i32, i32
  }
  func.func @transform_1(%arg0: i32) -> (i32, i32) {
    %c0_i32 = arith.constant 0 : i32
    %c0_i32_0 = arith.constant 0 : i32
    %c0_i32_1 = arith.constant 0 : i32
    return %c0_i32, %c0_i32_0 : i32, i32
  }
  func.func @transform_2(%arg0: i32) -> (i32, i32) {
    %c0_i32 = arith.constant 0 : i32
    %c0_i32_0 = arith.constant 0 : i32
    %c0_i32_1 = arith.constant 0 : i32
    return %c0_i32, %c0_i32_0 : i32, i32
  }
  func.func @transform_3(%arg0: i32) -> (i32, i32) {
    %c0_i32 = arith.constant 0 : i32
    %c0_i32_0 = arith.constant 0 : i32
    %c0_i32_1 = arith.constant 0 : i32
    return %c0_i32, %c0_i32_0 : i32, i32
  }
  func.func @transform_4(%arg0: i32) -> (i32, i32) {
    %c0_i32 = arith.constant 0 : i32
    %c0_i32_0 = arith.constant 0 : i32
    %c0_i32_1 = arith.constant 0 : i32
    return %c0_i32, %c0_i32_0 : i32, i32
  }
  func.func @transform_5(%arg0: i32) -> (i32, i32) {
    %c0_i32 = arith.constant 0 : i32
    %c0_i32_0 = arith.constant 0 : i32
    return %arg0, %c0_i32 : i32, i32
  }
}

</mosaic_0001>

<llo_original>
// kernel: projection_forward.1
$region0: #{projection_forward.1}
  #allocation0 [shape = 'u32[]', space=smem, size = 0x4, offset = 0x4, fixed_abs, tag = 'smem constant byte address 0x4 - core index']
  #allocation1 [shape = 'u32[144,128]{1,0:T(1,128)}', space=vmem, size = 0x12000, scoped, tag = 'internal scratch']
  %s0 = inlined_call_operand.vmem [shape: f32[16,32], index: 0, kind: input, shape index: {}]
  %s1 = inlined_call_operand.vmem [shape: f32[32,128], index: 1, kind: input, shape index: {}]
  %s2 = inlined_call_operand.vmem [shape: f32[1,128], index: 2, kind: input, shape index: {}]
  %s3 = inlined_call_operand.vmem [shape: f32[1,128], index: 3, kind: input, shape index: {}]
  %s4 = inlined_call_operand.vmem [shape: f32[1,128], index: 4, kind: input, shape index: {}]
  %s5 = inlined_call_operand.vmem [shape: f32[16,128], index: 5, kind: output, shape index: {}]
  %s6 = sld [smem:[#allocation0]]
  $region53: #{projection_forward.1} parent=0
    _
  %s8 = ssub.s32 1, %s6
  %s9 = scalar_select 0, %s8, %s6
  loop: start=0, step=1, limit=4
  $region2: #{projection_forward.1} parent=0 // loop_pre_header
    _
  $region3: #{projection_forward.1} parent=0 // loop_header
    %s11 = sphi 0, %s15
    %p12 = scmp.ge.s32.totalorder %s11, 4
    %s21 = sphi 0, %s23
    %s24 = sphi 0, %s21
    %s25 = sphi 0, %s24
    %s41 = sphi 0, %s25
    %s45 = sphi 0, %s45
    %s47 = sphi 0, %s45
    %s48 = sphi 0, %s47
    %s62 = sphi 0, %s48
    %s66 = sphi 0, %s66
    %s68 = sphi 0, %s66
    %s69 = sphi 0, %s68
    %s83 = sphi 0, %s69
    %s87 = sphi 0, %s87
    %s89 = sphi 0, %s87
    %s90 = sphi 0, %s89
    %s104 = sphi 0, %s90
    %s108 = sphi 0, %s108
    %s110 = sphi 0, %s108
    %s111 = sphi 0, %s110
    %s125 = sphi 0, %s111
    %s131 = sphi 0, %s133
    %s134 = sphi 0, %s131
    %s135 = sphi 0, %s134
    %s151 = sphi 0, %s135
  $region4: #{projection_forward.1} parent=0 // loop_header_branch
    %14 = sbr.rel (%p12) target = $region8
  $region5: #{projection_forward.1} parent=0 // loop_body
    %s16 = ssub.s32 %s11, 1
    %s17 = ssub.s32 %s11, 2
    %s18 = sadd.s32 %s11, 1
    %s19 = ssub.s32 %s11, %s18
    %p20 = scmp.eq.s32.totalorder %s19, 0
    %s22 = sadd.s32 %s21, 1
    %s23 = scalar_select %p20, %s21, %s22
    %p26 = pneg %p20
    %p27 = scmp.eq.s32.totalorder %s11, 1
    %p28 = por %p26, %p27
    %p29 = scmp.ne.s32.totalorder %s21, %s24
    %p30 = scmp.eq.s32.totalorder %s11, 0
    %p31 = por %p29, %p30
    %p32 = scmp.ne.s32.totalorder %s21, %s24
    %p33 = scmp.eq.s32.totalorder %s16, 1
    %p34 = por %p32, %p33
    %p35 = scmp.ne.s32.totalorder %s24, %s25
    %p36 = scmp.eq.s32.totalorder %s16, 0
    %p37 = por %p35, %p36
    %p38 = scmp.ne.s32.totalorder %s24, %s25
    %p39 = scmp.eq.s32.totalorder %s17, 1
    %p40 = por %p38, %p39
    %p42 = scmp.ne.s32.totalorder %s25, %s41
    %p43 = scmp.eq.s32.totalorder %s17, 0
    %p44 = por %p42, %p43
    %s46 = sadd.s32 %s45, 1
    %p49 = scmp.eq.s32.totalorder %s11, 1
    %p50 = scmp.ne.s32.totalorder %s45, %s47
    %p51 = scmp.eq.s32.totalorder %s11, 0
    %p52 = por %p50, %p51
    %p53 = scmp.ne.s32.totalorder %s45, %s47
    %p54 = scmp.eq.s32.totalorder %s16, 1
    %p55 = por %p53, %p54
    %p56 = scmp.ne.s32.totalorder %s47, %s48
    %p57 = scmp.eq.s32.totalorder %s16, 0
    %p58 = por %p56, %p57
    %p59 = scmp.ne.s32.totalorder %s47, %s48
    %p60 = scmp.eq.s32.totalorder %s17, 1
    %p61 = por %p59, %p60
    %p63 = scmp.ne.s32.totalorder %s48, %s62
    %p64 = scmp.eq.s32.totalorder %s17, 0
    %p65 = por %p63, %p64
    %s67 = sadd.s32 %s66, 1
    %p70 = scmp.eq.s32.totalorder %s11, 1
    %p71 = scmp.ne.s32.totalorder %s66, %s68
    %p72 = scmp.eq.s32.totalorder %s11, 0
    %p73 = por %p71, %p72
    %p74 = scmp.ne.s32.totalorder %s66, %s68
    %p75 = scmp.eq.s32.totalorder %s16, 1
    %p76 = por %p74, %p75
    %p77 = scmp.ne.s32.totalorder %s68, %s69
    %p78 = scmp.eq.s32.totalorder %s16, 0
    %p79 = por %p77, %p78
    %p80 = scmp.ne.s32.totalorder %s68, %s69
    %p81 = scmp.eq.s32.totalorder %s17, 1
    %p82 = por %p80, %p81
    %p84 = scmp.ne.s32.totalorder %s69, %s83
    %p85 = scmp.eq.s32.totalorder %s17, 0
    %p86 = por %p84, %p85
    %s88 = sadd.s32 %s87, 1
    %p91 = scmp.eq.s32.totalorder %s11, 1
    %p92 = scmp.ne.s32.totalorder %s87, %s89
    %p93 = scmp.eq.s32.totalorder %s11, 0
    %p94 = por %p92, %p93
    %p95 = scmp.ne.s32.totalorder %s87, %s89
    %p96 = scmp.eq.s32.totalorder %s16, 1
    %p97 = por %p95, %p96
    %p98 = scmp.ne.s32.totalorder %s89, %s90
    %p99 = scmp.eq.s32.totalorder %s16, 0
    %p100 = por %p98, %p99
    %p101 = scmp.ne.s32.totalorder %s89, %s90
    %p102 = scmp.eq.s32.totalorder %s17, 1
    %p103 = por %p101, %p102
    %p105 = scmp.ne.s32.totalorder %s90, %s104
    %p106 = scmp.eq.s32.totalorder %s17, 0
    %p107 = por %p105, %p106
    %s109 = sadd.s32 %s108, 1
    %p112 = scmp.eq.s32.totalorder %s11, 1
    %p113 = scmp.ne.s32.totalorder %s108, %s110
    %p114 = scmp.eq.s32.totalorder %s11, 0
    %p115 = por %p113, %p114
    %p116 = scmp.ne.s32.totalorder %s108, %s110
    %p117 = scmp.eq.s32.totalorder %s16, 1
    %p118 = por %p116, %p117
    %p119 = scmp.ne.s32.totalorder %s110, %s111
    %p120 = scmp.eq.s32.totalorder %s16, 0
    %p121 = por %p119, %p120
    %p122 = scmp.ne.s32.totalorder %s110, %s111
    %p123 = scmp.eq.s32.totalorder %s17, 1
    %p124 = por %p122, %p123
    %p126 = scmp.ne.s32.totalorder %s111, %s125
    %p127 = scmp.eq.s32.totalorder %s17, 0
    %p128 = por %p126, %p127
    %s129 = ssub.s32 %s11, %s18
    %p130 = scmp.eq.s32.totalorder %s129, 0
    %s132 = sadd.s32 %s131, 1
    %s133 = scalar_select %p130, %s131, %s132
    %p136 = pneg %p130
    %p137 = scmp.eq.s32.totalorder %s11, 1
    %p138 = por %p136, %p137
    %p139 = scmp.ne.s32.totalorder %s131, %s134
    %p140 = scmp.eq.s32.totalorder %s11, 0
    %p141 = por %p139, %p140
    %p142 = scmp.ne.s32.totalorder %s131, %s134
    %p143 = scmp.eq.s32.totalorder %s16, 1
    %p144 = por %p142, %p143
    %p145 = scmp.ne.s32.totalorder %s134, %s135
    %p146 = scmp.eq.s32.totalorder %s16, 0
    %p147 = por %p145, %p146
    %p148 = scmp.ne.s32.totalorder %s134, %s135
    %p149 = scmp.eq.s32.totalorder %s17, 1
    %p150 = por %p148, %p149
    %p152 = scmp.ne.s32.totalorder %s135, %s151
    %p153 = scmp.eq.s32.totalorder %s17, 0
    %p154 = por %p152, %p153
    %p155 = scmp.le.s32.totalorder 1, %s11
    %p156 = scmp.lt.s32.totalorder %s11, 3
    %p157 = pnand %p155, %p156
    %p158 = pneg %p157
    // Predicated region
    $region9: #{projection_forward.1} parent=5 // pred_check
      _
    $region10: #{projection_forward.1} parent=5 // pred_check_branch
      %160 = sbr.rel (%p157) target = $region12
    $region11: #{projection_forward.1} parent=5 // pred_region
      %s161 = ssub.s32 %s11, 1
      // Predicated region
      $region13: #{projection_forward.1} parent=11 // pred_check
        %p162 = pneg %p58
      $region14: #{projection_forward.1} parent=11 // pred_check_branch
        %164 = sbr.rel (%p162) target = $region16
      $region15: #{projection_forward.1} parent=11 // pred_region
        _
      $region16: #{projection_forward.1} parent=11 // pred_fallthru
        _
      // Predicated region
      $region17: #{projection_forward.1} parent=11 // pred_check
        %p165 = pneg %p79
      $region18: #{projection_forward.1} parent=11 // pred_check_branch
        %167 = sbr.rel (%p165) target = $region20
      $region19: #{projection_forward.1} parent=11 // pred_region
        _
      $region20: #{projection_forward.1} parent=11 // pred_fallthru
        _
      // Predicated region
      $region21: #{projection_forward.1} parent=11 // pred_check
        %p168 = pneg %p100
      $region22: #{projection_forward.1} parent=11 // pred_check_branch
        %170 = sbr.rel (%p168) target = $region24
      $region23: #{projection_forward.1} parent=11 // pred_region
        _
      $region24: #{projection_forward.1} parent=11 // pred_fallthru
        _
      // Predicated region
      $region25: #{projection_forward.1} parent=11 // pred_check
        %p171 = pneg %p121
      $region26: #{projection_forward.1} parent=11 // pred_check_branch
        %173 = sbr.rel (%p171) target = $region28
      $region27: #{projection_forward.1} parent=11 // pred_region
        _
      $region28: #{projection_forward.1} parent=11 // pred_fallthru
        _
    $region12: #{projection_forward.1} parent=5 // pred_fallthru
      _
    %p174 = scmp.lt.s32.totalorder %s11, 2
    // Predicated region
    $region29: #{projection_forward.1} parent=5 // pred_check
      %p175 = pneg %p174
    $region30: #{projection_forward.1} parent=5 // pred_check_branch
      %177 = sbr.rel (%p175) target = $region32
    $region31: #{projection_forward.1} parent=5 // pred_region
      // Predicated region
      $region33: #{projection_forward.1} parent=31 // pred_check
        %p178 = pneg %p31
      $region34: #{projection_forward.1} parent=31 // pred_check_branch
        %180 = sbr.rel (%p178) target = $region36
      $region35: #{projection_forward.1} parent=31 // pred_region
        %p181 = scmp.lt.s32.totalorder %s11, 1
        %s182 = scalar_select %p181, %s11, 1
        %s183 = smul.addr %s182, 8
        %s184 = scalar_lea.vmem %s0, %s183
      $region36: #{projection_forward.1} parent=31 // pred_fallthru
        _
    $region32: #{projection_forward.1} parent=5 // pred_fallthru
      _
    %p185 = scmp.le.s32.totalorder 1, %s11
    %p186 = scmp.lt.s32.totalorder %s11, 3
    %p187 = pnand %p185, %p186
    %p188 = pneg %p187
    // Predicated region
    $region37: #{projection_forward.1} parent=5 // pred_check
      _
    $region38: #{projection_forward.1} parent=5 // pred_check_branch
      %190 = sbr.rel (%p187) target = $region40
    $region39: #{projection_forward.1} parent=5 // pred_region
      %s191 = ssub.s32 %s11, 1
      %p192 = scmp.lt.s32.totalorder %s16, 1
      %s193 = scalar_select %p192, %s16, 1
      %s194 = smul.addr %s193, 8
      %s195 = scalar_lea.vmem %s0, %s194
      %p196 = pneg %p37
      %p197 = pneg %p34
      %p198 = pneg %p58
      %p199 = pneg %p55
      %p200 = pneg %p79
      %p201 = pneg %p76
      %p202 = pneg %p100
      %p203 = pneg %p97
      %p204 = pneg %p121
      %p205 = pneg %p118
      %p206 = pneg %p147
      %p207 = pneg %p144
      %p208 = scmp.lt.s32.totalorder %s16, 1
      %s209 = scalar_select %p208, %s16, 1
      %s210 = smul.addr %s209, 8
      %s211 = scalar_lea.vmem %s5, %s210
      %p212 = scmp.lt.s32.totalorder %s16, 1
      %s213 = scalar_select %p212, %s16, 1
      %s214 = smul.addr %s213, 8
      %s215 = scalar_lea.vmem %s0, %s214
      %p216 = scmp.lt.s32.totalorder %s16, 1
      %s217 = scalar_select %p216, %s16, 1
      %s218 = smul.addr %s217, 8
      %s219 = scalar_lea.vmem %s5, %s218
      %v220 = vld [vmem:[%s215] sm:$0xff]
      %v221 = vld [vmem:[%s1] sm:$0xff]
      %v222 = vld [vmem:[%s1 + $0x8] sm:$0xff]
      %v223 = vld [vmem:[%s1 + $0x10] sm:$0xff]
      %v224 = vld [vmem:[%s1 + $0x18] sm:$0xff]
      %v225 = vld [vmem:[%s2] sm:$0x1]
      %v227 = vlaneseq
      %v228 = vshrl.u32 %v227, 7
      %v229 = vsub.s32 0, %v228
      %v230 = vrot.slane %v225, %v229
      %vm232 = vcmask 261120
      %v234 = vsel %vm232, %v220, 0
      %236 = vmatprep.subr.mxu0 0.0
      %237 = vmatpush1.msra.mxu0 %v221
      %238 = vmatprep.subr.mxu0 0.0
      %239 = vmatpush1.msra.mxu0 %v222
      %240 = vmatprep.subr.mxu0 0.0
      %241 = vmatpush1.msra.mxu0 %v223
      %242 = vmatprep.subr.mxu0 0.0
      %243 = vmatpush1.msra.mxu0 %v224
      %244 = vmatprep.subr.mxu0 0.0
      %245 = vmatpush1.msra.mxu0 0.0
      %246 = vmatprep.subr.mxu0 0.0
      %247 = vmatpush1.msra.mxu0 0.0
      %248 = vmatprep.subr.mxu0 0.0
      %249 = vmatpush1.msra.mxu0 0.0
      %250 = vmatprep.subr.mxu0 0.0
      %251 = vmatpush1.msra.mxu0 0.0
      %252 = vmatprep.subr.mxu0 0.0
      %253 = vmatpush1.msra.mxu0 0.0
      %254 = vmatprep.subr.mxu0 0.0
      %255 = vmatpush1.msra.mxu0 0.0
      %256 = vmatprep.subr.mxu0 0.0
      %257 = vmatpush1.msra.mxu0 0.0
      %258 = vmatprep.subr.mxu0 0.0
      %259 = vmatpush1.msra.mxu0 0.0
      %260 = vmatprep.subr.mxu0 0.0
      %261 = vmatpush1.msra.mxu0 0.0
      %262 = vmatprep.subr.mxu0 0.0
      %263 = vmatpush1.msra.mxu0 0.0
      %264 = vmatprep.subr.mxu0 0.0
      %265 = vmatpush1.msra.mxu0 0.0
      %266 = vmatprep.subr.mxu0 0.0
      %267 = vmatpush1.msra.mxu0 0.0
      %268 = vmatprep.subr.mxu0 0.0
      %269 = vmatpush1.msra.mxu0 0.0
      %270 = vmatprep.subr.mxu0 0.0
      %271 = vmatpush1.msra.mxu0 0.0
      %272 = vmatprep.subr.mxu0 0.0
      %273 = vmatpush1.msra.mxu0 0.0
      %274 = vmatprep.subr.mxu0 0.0
      %275 = vmatpush1.msra.mxu0 0.0
      %276 = vmatprep.subr.mxu0 0.0
      %277 = vmatpush1.msra.mxu0 0.0
      %278 = vmatprep.subr.mxu0 0.0
      %279 = vmatpush1.msra.mxu0 0.0
      %280 = vmatprep.subr.mxu0 0.0
      %281 = vmatpush1.msra.mxu0 0.0
      %282 = vmatprep.subr.mxu0 0.0
      %283 = vmatpush1.msra.mxu0 0.0
      %284 = vmatprep.subr.mxu0 0.0
      %285 = vmatpush1.msra.mxu0 0.0
      %286 = vmatprep.subr.mxu0 0.0
      %287 = vmatpush1.msra.mxu0 0.0
      %288 = vmatprep.subr.mxu0 0.0
      %289 = vmatpush1.msra.mxu0 0.0
      %290 = vmatprep.subr.mxu0 0.0
      %291 = vmatpush1.msra.mxu0 0.0
      %292 = vmatprep.subr.mxu0 0.0
      %293 = vmatpush1.msra.mxu0 0.0
      %294 = vmatprep.subr.mxu0 0.0
      %295 = vmatpush1.msra.mxu0 0.0
      %296 = vmatprep.subr.mxu0 0.0
      %297 = vmatpush1.msra.mxu0 0.0
      %298 = vmatprep.subr.mxu0 0.0
      %299 = vmatpush1.msra.mxu0 0.0
      %300 = vmatprep.mubr.f32.mxu0 0.0
      %301 = vmatmul.mubr.f32.gmra.mrb[0].mxu0 %v234
      %v302 = vpop.f32.mrb[0].mxu0
      %v303 = vadd.f32 %v230, %v302
      %v304 = vpop.f32.mrb[0].mxu0
      %305 = vdwg.mxu0
      %v306 = vld [vmem:[%s3] sm:$0x1]
      %v307 = vld [vmem:[%s4] sm:$0x1]
      %308 = vadd.xlane.f32.xlu0 %v303
      %v309 = vpop.xlane.xlu0 %308
      %v310 = vmul.f32 %v303, %v303
      %311 = vadd.xlane.f32.xlu0 %v310
      %v312 = vpop.xlane.xlu0 %311
      %v313 = vmul.f32 %v309, 0.03125
      %v314 = vmul.f32 %v312, 0.03125
      %v315 = vmul.f32 %v313, %v313
      %v316 = vsub.f32 %v314, %v315
      %v317 = vmax.f32 %v316, 0.0
      %v318 = vsub.f32 %v303, %v313
      %v319 = vadd.f32 %v317, 1e-06
      %v320 = vrsqrt.pop %v319
      %v321 = vmul.f32 %v318, %v320
      %v323 = vlaneseq
      %v324 = vshrl.u32 %v323, 7
      %v325 = vsub.s32 0, %v324
      %v326 = vrot.slane %v306, %v325
      %v328 = vmul.f32 %v321, %v326
      %v330 = vlaneseq
      %v331 = vshrl.u32 %v330, 7
      %v332 = vsub.s32 0, %v331
      %v333 = vrot.slane %v307, %v332
      %v335 = vadd.f32 %v328, %v333
      %336 = vst [vmem:[%s219] sm:$0xff] %v335
      %p337 = scmp.lt.s32.totalorder %s16, 1
      %s338 = scalar_select %p337, %s16, 1
      %s339 = smul.addr %s338, 8
      %s340 = scalar_lea.vmem %s5, %s339
      // Predicated region
      $region41: #{projection_forward.1} parent=39 // pred_check
        %p341 = pneg %p144
      $region42: #{projection_forward.1} parent=39 // pred_check_branch
        %343 = sbr.rel (%p341) target = $region44
      $region43: #{projection_forward.1} parent=39 // pred_region
        _
      $region44: #{projection_forward.1} parent=39 // pred_fallthru
        _
    $region40: #{projection_forward.1} parent=5 // pred_fallthru
      _
    %p344 = scmp.le.s32.totalorder 2, %s11
    // Predicated region
    $region45: #{projection_forward.1} parent=5 // pred_check
      %p345 = pneg %p344
    $region46: #{projection_forward.1} parent=5 // pred_check_branch
      %347 = sbr.rel (%p345) target = $region48
    $region47: #{projection_forward.1} parent=5 // pred_region
      %s348 = ssub.s32 %s11, 2
      // Predicated region
      $region49: #{projection_forward.1} parent=47 // pred_check
        %p349 = pneg %p150
      $region50: #{projection_forward.1} parent=47 // pred_check_branch
        %351 = sbr.rel (%p349) target = $region52
      $region51: #{projection_forward.1} parent=47 // pred_region
        %p352 = scmp.lt.s32.totalorder %s17, 1
        %s353 = scalar_select %p352, %s17, 1
        %s354 = smul.addr %s353, 8
        %s355 = scalar_lea.vmem %s5, %s354
      $region52: #{projection_forward.1} parent=47 // pred_fallthru
        _
    $region48: #{projection_forward.1} parent=5 // pred_fallthru
      _
  $region6: #{projection_forward.1} parent=0 // loop_footer
    %s15 = sadd.s32 1, %s11
  $region7: #{projection_forward.1} parent=0 // loop_footer_branch
    %10 = sbr.rel target = $region3
  $region8: #{projection_forward.1} parent=0 // loop_exit
    _

</llo_original>
